<compile_context>
chip_gen: v7x
topology: tpu7x:2x2x1
jax: 0.10.0
libtpu: 0.0.40
codegen_flags: <defaults>
</compile_context>

<pallas_src>
import functools
import math

import jax
import jax.numpy as jnp
from jax.experimental import pallas as pl
from jax.experimental.pallas import tpu as pltpu


_VMEM_LIMIT = 48 * 1024 * 1024     # v7x-safe (64 MiB/TC); ample headroom on v5e/v6e.
_TILE_BUDGET = 32 * 1024 * 1024    # target resident bytes per grid step.


def _cp(n_axes):
    return pltpu.CompilerParams(
        dimension_semantics=("parallel",) * n_axes,
        vmem_limit_bytes=_VMEM_LIMIT,
    )


# ---------------------------------------------------------------------------
# 1x1 equalized-LR conv (+ bias, optional LeakyReLU, optional fused alpha blend).
# Input/output are flattened over (H, W) so the matmul M dim is th*wo and the
# store is a single lane-dense slab.
# ---------------------------------------------------------------------------
def _conv1x1_kernel(*refs, scale, neg_slope, blend_alpha):
    it = iter(refs)
    x_ref = next(it)                      # (1, th*wo, cin)
    w_ref = next(it)                      # (1, 1, cin, cout)
    b_ref = next(it)                      # (1, cout)
    new_ref = next(it) if blend_alpha is not None else None
    o_ref = next(it)                      # (1, th*wo, cout)

    y = jnp.dot(x_ref[0], w_ref[0, 0], preferred_element_type=jnp.float32)
    y = y * scale + b_ref[0, :]
    if neg_slope is not None:
        y = jnp.where(y >= 0, y, y * neg_slope)
    if blend_alpha is not None:
        # progressive-growing fade: alpha * new + (1 - alpha) * old(=this conv)
        y = blend_alpha * new_ref[0].astype(jnp.float32) + (1.0 - blend_alpha) * y
    o_ref[0] = y.astype(o_ref.dtype)


# ---------------------------------------------------------------------------
# 3x3 equalized-LR conv (+ bias + LeakyReLU [+ fused 2x2 avg-pool]).
# The padded input rows of this tile (plus a 2-row halo) are flattened into a
# (rows*wp, cin) VMEM window; every tap is one contiguous-slab matmul with
# M = th*wp accumulated into a (th*wp, cout) f32 slab.  Columns u >= wo of each
# row are wrap-around garbage and are never stored.
# ---------------------------------------------------------------------------
def _conv3x3_kernel(*refs, wp, wo, th, scale, neg_slope, pool, has_halo, win_rows):
    it = iter(refs)
    x_ref = next(it)                       # (1, th*wp, cin) or (1, (th+2)*wp, cin)
    halo_ref = next(it) if has_halo else None   # (1, 8*wp, cin)
    w_ref = next(it)                       # (3, 3, cin, cout)
    b_ref = next(it)                       # (1, cout)
    o_ref = next(it)                       # (1, th, wo, cout) or pooled
    acc_ref = next(it)                     # VMEM (th*wp, cout) f32
    win_ref = next(it)                     # VMEM (win_rows, cin) f32

    cin = win_ref.shape[-1]
    body_rows = th * wp if has_halo else (th + 2) * wp
    win_ref[0:body_rows, :] = x_ref[0]
    if has_halo:
        win_ref[body_rows:body_rows + 2 * wp, :] = halo_ref[0, 0:2 * wp, :]
    # Zero the alignment tail so overrunning tap slabs read finite values
    # (they only ever feed garbage columns that are never stored).
    win_ref[(th + 2) * wp:win_rows, :] = jnp.zeros(
        (win_rows - (th + 2) * wp, cin), jnp.float32)

    first = True
    for i in range(3):
        for j in range(3):
            off = i * wp + j
            slab = win_ref[off:off + th * wp, :]              # (th*wp, cin)
            contrib = jnp.dot(slab, w_ref[i, j],
                              preferred_element_type=jnp.float32)
            if first:
                acc_ref[...] = contrib
                first = False
            else:
                acc_ref[...] += contrib

    bias = b_ref[0, :]

    def epi(v):
        v = v * scale + bias
        if neg_slope is not None:
            v = jnp.where(v >= 0, v, v * neg_slope)
        return v

    if not pool:
        for t in range(th):
            row = epi(acc_ref[t * wp:t * wp + wo, :])          # (wo, cout)
            o_ref[0, t, :, :] = row.astype(o_ref.dtype)
    else:
        # Fused AvgPool2d(2): LeakyReLU first, then 2x2 mean via strided reads.
        # NOTE: strided pl.ds is only ever combined with a full trailing slice
        # (never with integer indexers) -- that pattern lowers cleanly.
        for t in range(th // 2):
            r0 = (2 * t) * wp
            r1 = (2 * t + 1) * wp
            p = (epi(acc_ref[pl.ds(r0, wo // 2, stride=2), :]) +
                 epi(acc_ref[pl.ds(r0 + 1, wo // 2, stride=2), :]) +
                 epi(acc_ref[pl.ds(r1, wo // 2, stride=2), :]) +
                 epi(acc_ref[pl.ds(r1 + 1, wo // 2, stride=2), :])) * 0.25
            o_ref[0, t, :, :] = p.astype(o_ref.dtype)


def _divisors_desc(n):
    return [d for d in range(n, 0, -1) if n % d == 0]


def _pick_row_tile(ho, wp, wo, cin, cout, kh, pool, has_blend):
    """Largest row tile th (th | ho) whose double-buffered working set fits."""
    w_bytes = 2 * kh * kh * cin * cout * 4
    smallest_valid = None
    for th in _divisors_desc(ho):
        nr = ho // th
        if pool and th % 2:
            continue
        if nr > 1:
            if kh == 3 and th % 8:
                continue
            if kh == 1 and (th * wo) % 8:
                continue
        smallest_valid = th
        if kh == 3:
            main_rows = th * wp if nr > 1 else (ho + 2) * wp
            halo_rows = 8 * wp if nr > 1 else 0
            in_b = 2 * (main_rows + halo_rows) * cin * 4
            win_b = (-(-((th + 2) * wp + 2) // 8) * 8) * cin * 4
            acc_b = th * wp * cout * 4
        else:
            in_b = 2 * th * wo * cin * 4
            win_b = 0
            acc_b = 0
        if pool:
            out_b = 2 * (th // 2) * (wo // 2) * cout * 4
        else:
            out_b = 2 * th * wo * cout * 4
        blend_b = out_b if has_blend else 0
        total = w_bytes + in_b + out_b + blend_b + win_b + acc_b + (1 << 20)
        if total <= _TILE_BUDGET:
            return th
    return smallest_valid if smallest_valid is not None else ho


def conv2d_e_fwd(x, params, pad, neg_slope=None, pool=False, blend=None, alpha=None):
    """Equalized-LR conv2d (stride 1, kernel 1 or 3) + bias [+ LeakyReLU]
    [+ fused AvgPool2d(2)] [+ fused alpha blend].  x: (N, H, W, Cin) NHWC f32."""
    w, b, scale = params["w"], params["b"], params["scale"]
    n, h, wdt, cin = x.shape
    kh, kw, _, cout = w.shape
    assert kh == kw and kh in (1, 3)
    ho = h + 2 * pad - kh + 1
    wo = wdt + 2 * pad - kw + 1
    wp = wdt + 2 * pad
    if pool:
        assert ho % 2 == 0 and wo % 2 == 0
    has_blend = blend is not None
    th = _pick_row_tile(ho, wp, wo, cin, cout, kh, pool, has_blend)
    nr = ho // th
    grid = (n, nr)
    b2 = b.reshape(1, cout)

    if kh == 1:
        assert pad == 0 and not pool
        x_flat = x.reshape(n, ho * wo, cin)
        in_specs = [
            pl.BlockSpec((1, th * wo, cin), lambda bi, r: (bi, r, 0)),
            pl.BlockSpec((1, 1, cin, cout), lambda bi, r: (0, 0, 0, 0)),
            pl.BlockSpec((1, cout), lambda bi, r: (0, 0)),
        ]
        args = [x_flat, w, b2]
        if has_blend:
            in_specs.append(pl.BlockSpec((1, th * wo, cout),
                                         lambda bi, r: (bi, r, 0)))
            args.append(blend.reshape(n, ho * wo, cout))
        kernel = functools.partial(
            _conv1x1_kernel, scale=scale, neg_slope=neg_slope,
            blend_alpha=(float(alpha) if has_blend else None))
        out = pl.pallas_call(
            kernel,
            out_shape=jax.ShapeDtypeStruct((n, ho * wo, cout), jnp.float32),
            grid=grid,
            in_specs=in_specs,
            out_specs=pl.BlockSpec((1, th * wo, cout), lambda bi, r: (bi, r, 0)),
            compiler_params=_cp(2),
        )(*args)
        return out.reshape(n, ho, wo, cout)

    # kh == 3
    assert not has_blend
    has_halo = nr > 1
    pad_bottom = pad + (6 if has_halo else 0)     # extra rows so the 8-row halo
    xp = jnp.pad(x, ((0, 0), (pad, pad_bottom), (pad, pad), (0, 0)))
    hp_rows = xp.shape[1]
    x_flat = xp.reshape(n, hp_rows * wp, cin)
    win_rows = -(-((th + 2) * wp + 2) // 8) * 8

    if has_halo:
        main_spec = pl.BlockSpec((1, th * wp, cin), lambda bi, r: (bi, r, 0))
    else:
        main_spec = pl.BlockSpec((1, hp_rows * wp, cin), lambda bi, r: (bi, 0, 0))
    in_specs = [main_spec]
    args = [x_flat]
    if has_halo:
        in_specs.append(pl.BlockSpec((1, 8 * wp, cin),
                                     lambda bi, r: (bi, (r + 1) * (th // 8), 0)))
        args.append(x_flat)
    in_specs += [
        pl.BlockSpec((3, 3, cin, cout), lambda bi, r: (0, 0, 0, 0)),
        pl.BlockSpec((1, cout), lambda bi, r: (0, 0)),
    ]
    args += [w, b2]

    if pool:
        out_shape = jax.ShapeDtypeStruct((n, ho // 2, wo // 2, cout), jnp.float32)
        out_spec = pl.BlockSpec((1, th // 2, wo // 2, cout),
                                lambda bi, r: (bi, r, 0, 0))
    else:
        out_shape = jax.ShapeDtypeStruct((n, ho, wo, cout), jnp.float32)
        out_spec = pl.BlockSpec((1, th, wo, cout), lambda bi, r: (bi, r, 0, 0))

    kernel = functools.partial(_conv3x3_kernel, wp=wp, wo=wo, th=th, scale=scale,
                               neg_slope=neg_slope, pool=pool,
                               has_halo=has_halo, win_rows=win_rows)
    return pl.pallas_call(
        kernel,
        out_shape=out_shape,
        grid=grid,
        in_specs=in_specs,
        out_specs=out_spec,
        scratch_shapes=[pltpu.VMEM((th * wp, cout), jnp.float32),
                        pltpu.VMEM((win_rows, cin), jnp.float32)],
        compiler_params=_cp(2),
    )(*args)


# ---------------------------------------------------------------------------
# Standalone AvgPool2d(2) (only used on the raw 3-channel input of the old
# fade-in path; the per-block pools are fused into the conv kernels).
# The wrapper reshapes (N, H, W, C) -> (N, H, W/2, 2*C) so column pairs are
# adjacent lane chunks; row pairs are read with static integer indices.  This
# avoids mixing integer indexers with strided slices (previous failure).
# ---------------------------------------------------------------------------
def _avgpool_kernel(x_ref, o_ref, *, th, c):
    for t in range(th):
        r0 = x_ref[0, 2 * t]          # (wo, 2*c): [even col | odd col] channels
        r1 = x_ref[0, 2 * t + 1]
        s = (r0[:, 0:c] + r0[:, c:2 * c] + r1[:, 0:c] + r1[:, c:2 * c]) * 0.25
        o_ref[0, t] = s.astype(o_ref.dtype)


def avg_pool2(x):
    n, h, wdt, c = x.shape
    ho, wo = h // 2, wdt // 2
    th = 1
    while th < 8 and ho % (th * 2) == 0:
        th *= 2
    x2 = x.reshape(n, h, wo, 2 * c)   # pack column pairs onto the lane axis
    kernel = functools.partial(_avgpool_kernel, th=th, c=c)
    return pl.pallas_call(
        kernel,
        out_shape=jax.ShapeDtypeStruct((n, ho, wo, c), x.dtype),
        grid=(n, ho // th),
        in_specs=[pl.BlockSpec((1, 2 * th, wo, 2 * c), lambda b, r: (b, r, 0, 0))],
        out_specs=pl.BlockSpec((1, th, wo, c), lambda b, r: (b, r, 0, 0)),
        compiler_params=_cp(2),
    )(x2)


# ---------------------------------------------------------------------------
# MiniBatchSTD: append one channel holding the batch-std scalar (4x4 feature map).
# ---------------------------------------------------------------------------
def _mbstd_kernel(x_ref, o_ref):
    x = x_ref[...].astype(jnp.float32)                 # (N, H, W, C)
    c = x.shape[-1]
    mean = jnp.mean(x, axis=0, keepdims=True)
    var = jnp.mean((x - mean) ** 2, axis=0)            # biased, matches reference
    std = jnp.sqrt(var + 1e-8)
    s = jnp.mean(std)
    o_ref[:, :, :, 0:c] = x_ref[...]
    o_ref[:, :, :, c:] = jnp.full(x.shape[:3] + (1,), s, dtype=o_ref.dtype)


def minibatch_std(x):
    n, h, w, c = x.shape
    return pl.pallas_call(
        _mbstd_kernel,
        out_shape=jax.ShapeDtypeStruct((n, h, w, c + 1), x.dtype),
        grid=(1,),
        in_specs=[pl.BlockSpec((n, h, w, c), lambda i: (0, 0, 0, 0))],
        out_specs=pl.BlockSpec((n, h, w, c + 1), lambda i: (0, 0, 0, 0)),
        compiler_params=_cp(1),
    )(x)


# ---------------------------------------------------------------------------
# Final head: 4x4 conv (pad 0) + LeakyReLU + Linear(512, 1), as two batched
# matmuls over N (folding the 16 taps into the contraction dim K = 16*512).
# ---------------------------------------------------------------------------
def _final_head_kernel(x_ref, w2_ref, b2_ref, wl_ref, bl_ref, o_ref,
                       *, s2, sl, neg_slope):
    h = jnp.dot(x_ref[...], w2_ref[...], preferred_element_type=jnp.float32)
    h = h * s2 + b2_ref[0, :]
    h = jnp.where(h >= 0, h, h * neg_slope)
    y = jnp.dot(h, wl_ref[...], preferred_element_type=jnp.float32)
    o_ref[...] = (y * sl + bl_ref[0, :]).astype(o_ref.dtype)


def final_head(x, c2, lin):
    n = x.shape[0]
    kk_h, kk_w, cin, cmid = c2["w"].shape             # (4, 4, 512, 512)
    kdim = kk_h * kk_w * cin
    x2 = x.reshape(n, kdim)                           # (N, 8192)  (H,W,C order)
    w2 = c2["w"].reshape(kdim, cmid)                  # matching (H,W,C) order
    wl = lin["w"].reshape(lin["w"].shape[2], lin["w"].shape[3])   # (512, 1)
    kernel = functools.partial(_final_head_kernel, s2=c2["scale"],
                               sl=lin["scale"], neg_slope=0.2)
    return pl.pallas_call(
        kernel,
        out_shape=jax.ShapeDtypeStruct((n, 1), jnp.float32),
        grid=(1,),
        in_specs=[
            pl.BlockSpec((n, kdim), lambda i: (0, 0)),
            pl.BlockSpec((kdim, cmid), lambda i: (0, 0)),
            pl.BlockSpec((1, cmid), lambda i: (0, 0)),
            pl.BlockSpec((cmid, 1), lambda i: (0, 0)),
            pl.BlockSpec((1, 1), lambda i: (0, 0)),
        ],
        out_specs=pl.BlockSpec((n, 1), lambda i: (0, 0)),
        compiler_params=_cp(1),
    )(x2, w2, c2["b"].reshape(1, cmid), wl, lin["b"].reshape(1, 1))


# ---------------------------------------------------------------------------
# Parameter init (deterministic; mirrors the PyTorch __init__ shapes/scales).
# ---------------------------------------------------------------------------
def _conv_param(key, cin, cout, k):
    w = jax.random.normal(key, (k, k, cin, cout), dtype=jnp.float32)   # HWIO
    b = jnp.zeros((cout,), jnp.float32)
    scale = math.sqrt(2.0) / math.sqrt(k * k * cin)                    # equalized LR
    return {"w": w, "b": b, "scale": scale}


def init_discriminator_params(key):
    keys = iter(jax.random.split(key, 64))
    start_ch = [512, 512, 512, 512, 256, 128, 64, 32, 16]   # start, start1..start8
    starts = [_conv_param(next(keys), 3, c, 1) for c in start_ch]
    blk_ch = {1: (512, 512, 512), 2: (512, 512, 512), 3: (512, 512, 512),
              4: (256, 256, 512), 5: (128, 128, 256), 6: (64, 64, 128),
              7: (32, 32, 64), 8: (16, 16, 32)}
    blocks = {i: (_conv_param(next(keys), a, m, 3),
                  _conv_param(next(keys), m, o, 3))
              for i, (a, m, o) in blk_ch.items()}
    final = {
        "c1": _conv_param(next(keys), 513, 512, 3),   # after MiniBatchSTD concat
        "c2": _conv_param(next(keys), 512, 512, 4),   # 4x4 -> 1x1
        "lin": _conv_param(next(keys), 512, 1, 1),    # Linear(512, 1)
    }
    return {"starts": starts, "blocks": blocks, "final": final}


# ---------------------------------------------------------------------------
# Discriminator forward (matches the PyTorch control flow).
# ---------------------------------------------------------------------------
def discriminator_forward(params, x_nhwc, res, alpha):
    k = int(math.log2(res)) - 2   # res == 4 * 2**k

    def apply_block(i, x):
        a, bprm = params["blocks"][i]
        x = conv2d_e_fwd(x, a, pad=1, neg_slope=0.2)
        # conv2 + LeakyReLU + AvgPool2d(2) fused into one kernel.
        return conv2d_e_fwd(x, bprm, pad=1, neg_slope=0.2, pool=True)

    def final_block(x):
        x = minibatch_std(x)                                             # (N,4,4,513)
        x = conv2d_e_fwd(x, params["final"]["c1"], pad=1, neg_slope=0.2)  # (N,4,4,512)
        return final_head(x, params["final"]["c2"], params["final"]["lin"])

    if k == 0:
        out = conv2d_e_fwd(x_nhwc, params["starts"][0], pad=0)
        return final_block(out)

    out = conv2d_e_fwd(x_nhwc, params["starts"][k], pad=0)
    out = apply_block(k, out)
    if alpha >= 0:
        # Fade-in: old path = start_{k-1}(avgpool(input)); blend fused into the conv.
        old_in = avg_pool2(x_nhwc)
        out = conv2d_e_fwd(old_in, params["starts"][k - 1], pad=0,
                           blend=out, alpha=alpha)
    for i in range(k - 1, 0, -1):
        out = apply_block(i, out)
    return final_block(out)


if __name__ == "__main__":
    key = jax.random.PRNGKey(0)
    params = init_discriminator_params(key)

    # Demo at res=8 with fade-in alpha=0.5 (exercises start1, block1 with the
    # fused conv+pool, the fused blend, minibatch-std, c1 and the fused head).
    # PyTorch input would be NCHW (2, 3, 8, 8); here NHWC.
    x = jax.random.normal(jax.random.fold_in(key, 123), (2, 8, 8, 3), jnp.float32)

    out = discriminator_forward(params, x, res=8, alpha=0.5)
    out = jax.block_until_ready(out)
    assert out.shape == (2, 1), out.shape
    print("KERNEL_OK")
</pallas_src>

<mosaic_0001>
module attributes {stable_mosaic.version = 11 : i64} {
  func.func @_conv1x1_kernel(%arg0: i32, %arg1: i32, %arg2: memref<1x64x3xf32, #tpu.memory_space<vmem>>, %arg3: memref<1x1x3x512xf32, #tpu.memory_space<vmem>>, %arg4: memref<1x512xf32, #tpu.memory_space<vmem>>, %arg5: memref<1x64x512xf32, #tpu.memory_space<vmem>>) attributes {dimension_semantics = [#tpu.dimension_semantics<parallel>, #tpu.dimension_semantics<parallel>], iteration_bounds = array<i64: 2, 1>, scalar_prefetch = 0 : i64, scratch_operands = 0 : i64, tpu.core_type = #tpu.core_type<tc>, window_params = [{transform_indices = @transform_0, window_bounds = array<i64: 1, 64, 3>}, {pipeline_mode = #tpu.pipeline_mode<synchronous>, transform_indices = @transform_1, window_bounds = array<i64: 1, 1, 3, 512>}, {pipeline_mode = #tpu.pipeline_mode<synchronous>, transform_indices = @transform_2, window_bounds = array<i64: 1, 512>}, {transform_indices = @transform_3, window_bounds = array<i64: 1, 64, 512>}]} {
    %c0 = arith.constant 0 : index
    %c0_0 = arith.constant 0 : index
    %c0_1 = arith.constant 0 : index
    %0 = vector.load %arg2[%c0, %c0_0, %c0_1] : memref<1x64x3xf32, #tpu.memory_space<vmem>>, vector<1x64x3xf32>
    %1 = vector.shape_cast %0 : vector<1x64x3xf32> to vector<64x3xf32>
    %c0_2 = arith.constant 0 : index
    %c0_3 = arith.constant 0 : index
    %c0_4 = arith.constant 0 : index
    %c0_5 = arith.constant 0 : index
    %2 = vector.load %arg3[%c0_2, %c0_3, %c0_4, %c0_5] : memref<1x1x3x512xf32, #tpu.memory_space<vmem>>, vector<1x1x3x512xf32>
    %3 = vector.shape_cast %2 : vector<1x1x3x512xf32> to vector<3x512xf32>
    %cst = arith.constant dense<0.000000e+00> : vector<64x512xf32>
    %4 = tpu.matmul %1, %3, %cst {dimension_numbers = #tpu.dot_dimension_numbers<[1], [0], [0], [1], [0, 0, 1, 1], [], []>} : vector<64x3xf32>, vector<3x512xf32>, vector<64x512xf32> -> vector<64x512xf32>
    %cst_6 = arith.constant 0.816496611 : f32
    %5 = vector.broadcast %cst_6 : f32 to vector<64x512xf32>
    %6 = arith.mulf %4, %5 : vector<64x512xf32>
    %c0_7 = arith.constant 0 : index
    %c0_8 = arith.constant 0 : index
    %7 = vector.load %arg4[%c0_7, %c0_8] : memref<1x512xf32, #tpu.memory_space<vmem>>, vector<1x512xf32>
    %8 = vector.shape_cast %7 : vector<1x512xf32> to vector<512xf32>
    %9 = vector.shape_cast %8 : vector<512xf32> to vector<1x512xf32>
    %10 = vector.broadcast %9 : vector<1x512xf32> to vector<64x512xf32>
    %11 = arith.addf %6, %10 : vector<64x512xf32>
    %c0_9 = arith.constant 0 : index
    %c0_10 = arith.constant 0 : index
    %c0_11 = arith.constant 0 : index
    %12 = vector.load %arg5[%c0_9, %c0_10, %c0_11] : memref<1x64x512xf32, #tpu.memory_space<vmem>>, vector<1x64x512xf32>
    %13 = vector.shape_cast %12 : vector<1x64x512xf32> to vector<64x512xf32>
    %14 = vector.shape_cast %11 : vector<64x512xf32> to vector<1x64x512xf32>
    tpu.vector_store %arg5[%c0_9, %c0_10, %c0_11], %14 {strides = array<i32>} : memref<1x64x512xf32, #tpu.memory_space<vmem>>, vector<1x64x512xf32>,
    return
  }
  func.func @transform_0(%arg0: i32, %arg1: i32) -> (i32, i32, i32) {
    %c0_i32 = arith.constant 0 : i32
    %c0_i32_0 = arith.constant 0 : i32
    return %arg0, %arg1, %c0_i32 : i32, i32, i32
  }
  func.func @transform_1(%arg0: i32, %arg1: i32) -> (i32, i32, i32, i32) {
    %c0_i32 = arith.constant 0 : i32
    %c0_i32_0 = arith.constant 0 : i32
    %c0_i32_1 = arith.constant 0 : i32
    %c0_i32_2 = arith.constant 0 : i32
    %c0_i32_3 = arith.constant 0 : i32
    return %c0_i32, %c0_i32_0, %c0_i32_1, %c0_i32_2 : i32, i32, i32, i32
  }
  func.func @transform_2(%arg0: i32, %arg1: i32) -> (i32, i32) {
    %c0_i32 = arith.constant 0 : i32
    %c0_i32_0 = arith.constant 0 : i32
    %c0_i32_1 = arith.constant 0 : i32
    return %c0_i32, %c0_i32_0 : i32, i32
  }
  func.func @transform_3(%arg0: i32, %arg1: i32) -> (i32, i32, i32) {
    %c0_i32 = arith.constant 0 : i32
    %c0_i32_0 = arith.constant 0 : i32
    return %arg0, %arg1, %c0_i32 : i32, i32, i32
  }
}

</mosaic_0001>

<llo_original>
// kernel: tpu_custom_call.1
$region0: #{tpu_custom_call.1}
  #allocation0 [shape = 'u32[]', space=smem, size = 0x4, offset = 0x4, fixed_abs, tag = 'smem constant byte address 0x4 - core index']
  #allocation1 [shape = 'u32[144,128]{1,0:T(1,128)}', space=vmem, size = 0x12000, scoped, tag = 'internal scratch']
  %s0 = inlined_call_operand.vmem [shape: f32[2,64,3], index: 0, kind: input, shape index: {}]
  %s1 = inlined_call_operand.vmem [shape: f32[1,1,3,512], index: 1, kind: input, shape index: {}]
  %s2 = inlined_call_operand.vmem [shape: f32[1,512], index: 2, kind: input, shape index: {}]
  %s3 = inlined_call_operand.hbm [shape: f32[2,64,512], index: 3, kind: output, shape index: {}]
  %s4 = sld [smem:[#allocation0]]
  $region45: #{tpu_custom_call.1} parent=0
    _
  %s6 = ssub.s32 1, %s4
  %s7 = scalar_select 0, %s6, %s4
  $region1: #{tpu_custom_call.1} parent=0
    #allocation2 [shape = 'u8[262144]{0}', space=vmem, size = 0x40000, scoped, tag = 'output window, operand 0']
    #allocation3 [shape = 's32[2]{0}', space=sflag, size = 0x8, scoped, tag = 'scoped memory for tpu_custom_call.1']
    %8 = vsyncpa [#allocation3], 0
    %s9 = scalar_lea.sflag [#allocation3], 1
    %10 = vsyncpa %s9, 0
    loop: start=0, step=1, limit=4
    $region2: #{tpu_custom_call.1} parent=1 // loop_pre_header
      _
    $region3: #{tpu_custom_call.1} parent=1 // loop_header
      %s12 = sphi 0, %s16
      %p13 = scmp.ge.s32.totalorder %s12, 4
      %s19 = sphi 0, %s31
      %s20 = sphi 0, %s27
      %s21 = sphi 0, %s19
      %s22 = sphi 0, %s20
      %s23 = sphi 0, %s21
      %s24 = sphi 0, %s22
      %s36 = sphi 0, %s38
      %s39 = sphi 0, %s36
      %s40 = sphi 0, %s39
      %s56 = sphi 0, %s40
      %s60 = sphi 0, %s60
      %s62 = sphi 0, %s60
      %s63 = sphi 0, %s62
      %s77 = sphi 0, %s63
      %s81 = sphi 0, %s81
      %s83 = sphi 0, %s81
      %s84 = sphi 0, %s83
      %s98 = sphi 0, %s84
      %s106 = sphi 0, %s108
      %s109 = sphi 0, %s106
      %s110 = sphi 0, %s109
      %s126 = sphi 0, %s110
    $region4: #{tpu_custom_call.1} parent=1 // loop_header_branch
      %15 = sbr.rel (%p13) target = $region8
    $region5: #{tpu_custom_call.1} parent=1 // loop_body
      %s17 = ssub.s32 %s12, 1
      %s18 = ssub.s32 %s12, 2
      %s25 = sadd.s32 1, %s20
      %p26 = scmp.ge.s32.totalorder %s25, 1
      %s27 = scalar_select %p26, 0, %s25
      %s28 = sadd.s32 1, %s19
      %s29 = scalar_select %p26, %s28, %s19
      %p30 = scmp.ge.s32.totalorder %s29, 2
      %s31 = scalar_select %p30, 0, %s29
      %s32 = ssub.s32 %s19, %s31
      %s33 = ssub.s32 %s20, %s27
      %s34 = sor.u32 %s32, %s33
      %p35 = scmp.eq.s32.totalorder %s34, 0
      %s37 = sadd.s32 %s36, 1
      %s38 = scalar_select %p35, %s36, %s37
      %p41 = pneg %p35
      %p42 = scmp.eq.s32.totalorder %s12, 1
      %p43 = por %p41, %p42
      %p44 = scmp.ne.s32.totalorder %s36, %s39
      %p45 = scmp.eq.s32.totalorder %s12, 0
      %p46 = por %p44, %p45
      %p47 = scmp.ne.s32.totalorder %s36, %s39
      %p48 = scmp.eq.s32.totalorder %s17, 1
      %p49 = por %p47, %p48
      %p50 = scmp.ne.s32.totalorder %s39, %s40
      %p51 = scmp.eq.s32.totalorder %s17, 0
      %p52 = por %p50, %p51
      %p53 = scmp.ne.s32.totalorder %s39, %s40
      %p54 = scmp.eq.s32.totalorder %s18, 1
      %p55 = por %p53, %p54
      %p57 = scmp.ne.s32.totalorder %s40, %s56
      %p58 = scmp.eq.s32.totalorder %s18, 0
      %p59 = por %p57, %p58
      %s61 = sadd.s32 %s60, 1
      %p64 = scmp.eq.s32.totalorder %s12, 1
      %p65 = scmp.ne.s32.totalorder %s60, %s62
      %p66 = scmp.eq.s32.totalorder %s12, 0
      %p67 = por %p65, %p66
      %p68 = scmp.ne.s32.totalorder %s60, %s62
      %p69 = scmp.eq.s32.totalorder %s17, 1
      %p70 = por %p68, %p69
      %p71 = scmp.ne.s32.totalorder %s62, %s63
      %p72 = scmp.eq.s32.totalorder %s17, 0
      %p73 = por %p71, %p72
      %p74 = scmp.ne.s32.totalorder %s62, %s63
      %p75 = scmp.eq.s32.totalorder %s18, 1
      %p76 = por %p74, %p75
      %p78 = scmp.ne.s32.totalorder %s63, %s77
      %p79 = scmp.eq.s32.totalorder %s18, 0
      %p80 = por %p78, %p79
      %s82 = sadd.s32 %s81, 1
      %p85 = scmp.eq.s32.totalorder %s12, 1
      %p86 = scmp.ne.s32.totalorder %s81, %s83
      %p87 = scmp.eq.s32.totalorder %s12, 0
      %p88 = por %p86, %p87
      %p89 = scmp.ne.s32.totalorder %s81, %s83
      %p90 = scmp.eq.s32.totalorder %s17, 1
      %p91 = por %p89, %p90
      %p92 = scmp.ne.s32.totalorder %s83, %s84
      %p93 = scmp.eq.s32.totalorder %s17, 0
      %p94 = por %p92, %p93
      %p95 = scmp.ne.s32.totalorder %s83, %s84
      %p96 = scmp.eq.s32.totalorder %s18, 1
      %p97 = por %p95, %p96
      %p99 = scmp.ne.s32.totalorder %s84, %s98
      %p100 = scmp.eq.s32.totalorder %s18, 0
      %p101 = por %p99, %p100
      %s102 = ssub.s32 %s19, %s31
      %s103 = ssub.s32 %s20, %s27
      %s104 = sor.u32 %s102, %s103
      %p105 = scmp.eq.s32.totalorder %s104, 0
      %s107 = sadd.s32 %s106, 1
      %s108 = scalar_select %p105, %s106, %s107
      %p111 = pneg %p105
      %p112 = scmp.eq.s32.totalorder %s12, 1
      %p113 = por %p111, %p112
      %p114 = scmp.ne.s32.totalorder %s106, %s109
      %p115 = scmp.eq.s32.totalorder %s12, 0
      %p116 = por %p114, %p115
      %p117 = scmp.ne.s32.totalorder %s106, %s109
      %p118 = scmp.eq.s32.totalorder %s17, 1
      %p119 = por %p117, %p118
      %p120 = scmp.ne.s32.totalorder %s109, %s110
      %p121 = scmp.eq.s32.totalorder %s17, 0
      %p122 = por %p120, %p121
      %p123 = scmp.ne.s32.totalorder %s109, %s110
      %p124 = scmp.eq.s32.totalorder %s18, 1
      %p125 = por %p123, %p124
      %p127 = scmp.ne.s32.totalorder %s110, %s126
      %p128 = scmp.eq.s32.totalorder %s18, 0
      %p129 = por %p127, %p128
      %p130 = scmp.le.s32.totalorder 1, %s12
      %p131 = scmp.lt.s32.totalorder %s12, 3
      %p132 = pnand %p130, %p131
      %p133 = pneg %p132
      // Predicated region
      $region9: #{tpu_custom_call.1} parent=5 // pred_check
        _
      $region10: #{tpu_custom_call.1} parent=5 // pred_check_branch
        %135 = sbr.rel (%p132) target = $region12
      $region11: #{tpu_custom_call.1} parent=5 // pred_region
        %s136 = ssub.s32 %s12, 1
        // Predicated region
        $region13: #{tpu_custom_call.1} parent=11 // pred_check
          %p137 = pneg %p73
        $region14: #{tpu_custom_call.1} parent=11 // pred_check_branch
          %139 = sbr.rel (%p137) target = $region16
        $region15: #{tpu_custom_call.1} parent=11 // pred_region
          _
        $region16: #{tpu_custom_call.1} parent=11 // pred_fallthru
          _
        // Predicated region
        $region17: #{tpu_custom_call.1} parent=11 // pred_check
          %p140 = pneg %p94
        $region18: #{tpu_custom_call.1} parent=11 // pred_check_branch
          %142 = sbr.rel (%p140) target = $region20
        $region19: #{tpu_custom_call.1} parent=11 // pred_region
          _
        $region20: #{tpu_custom_call.1} parent=11 // pred_fallthru
          _
      $region12: #{tpu_custom_call.1} parent=5 // pred_fallthru
        _
      %p143 = scmp.lt.s32.totalorder %s12, 2
      // Predicated region
      $region21: #{tpu_custom_call.1} parent=5 // pred_check
        %p144 = pneg %p143
      $region22: #{tpu_custom_call.1} parent=5 // pred_check_branch
        %146 = sbr.rel (%p144) target = $region24
      $region23: #{tpu_custom_call.1} parent=5 // pred_region
        // Predicated region
        $region25: #{tpu_custom_call.1} parent=23 // pred_check
          %p147 = pneg %p46
        $region26: #{tpu_custom_call.1} parent=23 // pred_check_branch
          %149 = sbr.rel (%p147) target = $region28
        $region27: #{tpu_custom_call.1} parent=23 // pred_region
          %s150 = smul.u32 8, %s20
          %p151 = scmp.lt.s32.totalorder %s19, 1
          %s152 = scalar_select %p151, %s19, 1
          %p153 = scmp.lt.s32.totalorder %s150, 7
          %s154 = scalar_select %p153, %s150, 7
          %s155 = smul.addr %s152, 8
          %s156 = sadd.s32 %s154, %s155
          %s157 = smul.addr %s156, 8
          %s158 = scalar_lea.vmem %s0, %s157
          %s159 = smul.u32 8, %s20
        $region28: #{tpu_custom_call.1} parent=23 // pred_fallthru
          _
      $region24: #{tpu_custom_call.1} parent=5 // pred_fallthru
        _
      %p160 = scmp.le.s32.totalorder 1, %s12
      %p161 = scmp.lt.s32.totalorder %s12, 3
      %p162 = pnand %p160, %p161
      %p163 = pneg %p162
      // Predicated region
      $region29: #{tpu_custom_call.1} parent=5 // pred_check
        _
      $region30: #{tpu_custom_call.1} parent=5 // pred_check_branch
        %165 = sbr.rel (%p162) target = $region32
      $region31: #{tpu_custom_call.1} parent=5 // pred_region
        %s166 = ssub.s32 %s12, 1
        %s167 = smul.u32 8, %s22
        %p168 = scmp.lt.s32.totalorder %s21, 1
        %s169 = scalar_select %p168, %s21, 1
        %p170 = scmp.lt.s32.totalorder %s167, 7
        %s171 = scalar_select %p170, %s167, 7
        %s172 = smul.addr %s169, 8
        %s173 = sadd.s32 %s171, %s172
        %s174 = smul.addr %s173, 8
        %s175 = scalar_lea.vmem %s0, %s174
        %p176 = pneg %p52
        %p177 = pneg %p49
        %p178 = pneg %p73
        %p179 = pneg %p70
        %p180 = pneg %p94
        %p181 = pneg %p91
        %p182 = pneg %p122
        %p183 = pneg %p119
        %s184 = sand.u32 %s109, 1
        %s185 = scalar_lea.sflag [#allocation3], %s184
        %s186 = sand.u32 %s109, 1
        %s187 = smul.addr %s186, 256
        %s188 = scalar_lea.vmem [#allocation2], %s187
        %s189 = smul.u32 8, %s22
        %p190 = scmp.lt.s32.totalorder %s21, 1
        %s191 = scalar_select %p190, %s21, 1
        %p192 = scmp.lt.s32.totalorder %s189, 7
        %s193 = scalar_select %p192, %s189, 7
        %s194 = smul.addr %s191, 8
        %s195 = sadd.s32 %s193, %s194
        %s196 = smul.addr %s195, 8
        %s197 = scalar_lea.vmem %s0, %s196
        %s198 = smul.u32 8, %s22
        %s199 = smul.u32 8, %s22
        %v200 = vld [vmem:[%s197] sm:$0xff]
        %v201 = vld [vmem:[%s197 + $0x8] sm:$0xff]
        %v202 = vld [vmem:[%s197 + $0x10] sm:$0xff]
        %v203 = vld [vmem:[%s197 + $0x18] sm:$0xff]
        %v204 = vld [vmem:[%s197 + $0x20] sm:$0xff]
        %v205 = vld [vmem:[%s197 + $0x28] sm:$0xff]
        %v206 = vld [vmem:[%s197 + $0x30] sm:$0xff]
        %v207 = vld [vmem:[%s197 + $0x38] sm:$0xff]
        %v208 = vld [vmem:[%s1] sm:$0x77]
        %v209 = vld [vmem:[%s1 + $0x8] sm:$0x77]
        %v212 = vcombine.high %v208, %v208
        %v213 = vcombine.high %v209, %v209
        %vm214 = vcmask 23552
        %v216 = vsel %vm214, %v200, 0
        %v219 = vsel %vm214, %v201, 0
        %v222 = vsel %vm214, %v202, 0
        %v225 = vsel %vm214, %v203, 0
        %v228 = vsel %vm214, %v204, 0
        %v231 = vsel %vm214, %v205, 0
        %v234 = vsel %vm214, %v206, 0
        %v237 = vsel %vm214, %v207, 0
        %vm239 = vcmask 1042432
        %v240 = vsel %vm239, %v208, 0
        %v242 = vsel %vm239, %v212, 0
        %v244 = vsel %vm239, %v209, 0
        %v246 = vsel %vm239, %v213, 0
        %248 = vmatprep.subr.mxu0 %v242
        %249 = vmatpush1.msra.mxu0 %v240
        %250 = vmatprep.subr.mxu0 0.0
        %251 = vmatpush1.msra.mxu0 0.0
        %252 = vmatprep.subr.mxu0 0.0
        %253 = vmatpush1.msra.mxu0 0.0
        %254 = vmatprep.subr.mxu0 0.0
        %255 = vmatpush1.msra.mxu0 0.0
        %256 = vmatprep.subr.mxu0 0.0
        %257 = vmatpush1.msra.mxu0 0.0
        %258 = vmatprep.subr.mxu0 0.0
        %259 = vmatpush1.msra.mxu0 0.0
        %260 = vmatprep.subr.mxu0 0.0
        %261 = vmatpush1.msra.mxu0 0.0
        %262 = vmatprep.subr.mxu0 0.0
        %263 = vmatpush1.msra.mxu0 0.0
        %264 = vmatprep.subr.mxu0 0.0
        %265 = vmatpush1.msra.mxu0 0.0
        %266 = vmatprep.subr.mxu0 0.0
        %267 = vmatpush1.msra.mxu0 0.0
        %268 = vmatprep.subr.mxu0 0.0
        %269 = vmatpush1.msra.mxu0 0.0
        %270 = vmatprep.subr.mxu0 0.0
        %271 = vmatpush1.msra.mxu0 0.0
        %272 = vmatprep.subr.mxu0 0.0
        %273 = vmatpush1.msra.mxu0 0.0
        %274 = vmatprep.subr.mxu0 0.0
        %275 = vmatpush1.msra.mxu0 0.0
        %276 = vmatprep.subr.mxu0 0.0
        %277 = vmatpush1.msra.mxu0 0.0
        %278 = vmatprep.subr.mxu0 0.0
        %279 = vmatpush1.msra.mxu0 0.0
        %280 = vmatprep.subr.mxu0 0.0
        %281 = vmatpush1.msra.mxu0 0.0
        %282 = vmatprep.subr.mxu0 0.0
        %283 = vmatpush1.msra.mxu0 0.0
        %284 = vmatprep.subr.mxu0 0.0
        %285 = vmatpush1.msra.mxu0 0.0
        %286 = vmatprep.subr.mxu0 0.0
        %287 = vmatpush1.msra.mxu0 0.0
        %288 = vmatprep.subr.mxu0 0.0
        %289 = vmatpush1.msra.mxu0 0.0
        %290 = vmatprep.subr.mxu0 0.0
        %291 = vmatpush1.msra.mxu0 0.0
        %292 = vmatprep.subr.mxu0 0.0
        %293 = vmatpush1.msra.mxu0 0.0
        %294 = vmatprep.subr.mxu0 0.0
        %295 = vmatpush1.msra.mxu0 0.0
        %296 = vmatprep.subr.mxu0 0.0
        %297 = vmatpush1.msra.mxu0 0.0
        %298 = vmatprep.subr.mxu0 0.0
        %299 = vmatpush1.msra.mxu0 0.0
        %300 = vmatprep.subr.mxu0 0.0
        %301 = vmatpush1.msra.mxu0 0.0
        %302 = vmatprep.subr.mxu0 0.0
        %303 = vmatpush1.msra.mxu0 0.0
        %304 = vmatprep.subr.mxu0 0.0
        %305 = vmatpush1.msra.mxu0 0.0
        %306 = vmatprep.subr.mxu0 0.0
        %307 = vmatpush1.msra.mxu0 0.0
        %308 = vmatprep.subr.mxu0 0.0
        %309 = vmatpush1.msra.mxu0 0.0
        %310 = vmatprep.subr.mxu0 0.0
        %311 = vmatpush1.msra.mxu0 0.0
        %312 = vmatprep.mubr.f32.mxu0 0.0
        %313 = vmatmul.mubr.f32.gmra.mrb[0].mxu0 %v216
        %v314 = vpop.f32.mrb[0].mxu0
        %v315 = vadd.f32 0.0, %v314
        %v316 = vpop.f32.mrb[0].mxu0
        %v317 = vadd.f32 0.0, %v316
        %318 = vmatprep.mubr.f32.mxu0 0.0
        %319 = vmatmul.mubr.f32.gmra.mrb[0].mxu0 %v219
        %v320 = vpop.f32.mrb[0].mxu0
        %v321 = vadd.f32 0.0, %v320
        %v322 = vpop.f32.mrb[0].mxu0
        %v323 = vadd.f32 0.0, %v322
        %324 = vmatprep.mubr.f32.mxu0 0.0
        %325 = vmatmul.mubr.f32.gmra.mrb[0].mxu0 %v222
        %v326 = vpop.f32.mrb[0].mxu0
        %v327 = vadd.f32 0.0, %v326
        %v328 = vpop.f32.mrb[0].mxu0
        %v329 = vadd.f32 0.0, %v328
        %330 = vmatprep.mubr.f32.mxu0 0.0
        %331 = vmatmul.mubr.f32.gmra.mrb[0].mxu0 %v225
        %v332 = vpop.f32.mrb[0].mxu0
        %v333 = vadd.f32 0.0, %v332
        %v334 = vpop.f32.mrb[0].mxu0
        %v335 = vadd.f32 0.0, %v334
        %336 = vmatprep.mubr.f32.mxu0 0.0
        %337 = vmatmul.mubr.f32.gmra.mrb[0].mxu0 %v228
        %v338 = vpop.f32.mrb[0].mxu0
        %v339 = vadd.f32 0.0, %v338
        %v340 = vpop.f32.mrb[0].mxu0
        %v341 = vadd.f32 0.0, %v340
        %342 = vmatprep.mubr.f32.mxu0 0.0
        %343 = vmatmul.mubr.f32.gmra.mrb[0].mxu0 %v231
        %v344 = vpop.f32.mrb[0].mxu0
        %v345 = vadd.f32 0.0, %v344
        %v346 = vpop.f32.mrb[0].mxu0
        %v347 = vadd.f32 0.0, %v346
        %348 = vmatprep.mubr.f32.mxu0 0.0
        %349 = vmatmul.mubr.f32.gmra.mrb[0].mxu0 %v234
        %v350 = vpop.f32.mrb[0].mxu0
        %v351 = vadd.f32 0.0, %v350
        %v352 = vpop.f32.mrb[0].mxu0
        %v353 = vadd.f32 0.0, %v352
        %354 = vmatprep.mubr.f32.mxu0 0.0
        %355 = vmatmul.mubr.f32.gmra.mrb[0].mxu0 %v237
        %v356 = vpop.f32.mrb[0].mxu0
        %v357 = vadd.f32 0.0, %v356
        %v358 = vpop.f32.mrb[0].mxu0
        %v359 = vadd.f32 0.0, %v358
        %360 = vdwg.mxu0
        %361 = vmatprep.subr.mxu0 %v246
        %362 = vmatpush1.msra.mxu0 %v244
        %363 = vmatprep.subr.mxu0 0.0
        %364 = vmatpush1.msra.mxu0 0.0
        %365 = vmatprep.subr.mxu0 0.0
        %366 = vmatpush1.msra.mxu0 0.0
        %367 = vmatprep.subr.mxu0 0.0
        %368 = vmatpush1.msra.mxu0 0.0
        %369 = vmatprep.subr.mxu0 0.0
        %370 = vmatpush1.msra.mxu0 0.0
        %371 = vmatprep.subr.mxu0 0.0
        %372 = vmatpush1.msra.mxu0 0.0
        %373 = vmatprep.subr.mxu0 0.0
        %374 = vmatpush1.msra.mxu0 0.0
        %375 = vmatprep.subr.mxu0 0.0
        %376 = vmatpush1.msra.mxu0 0.0
        %377 = vmatprep.subr.mxu0 0.0
        %378 = vmatpush1.msra.mxu0 0.0
        %379 = vmatprep.subr.mxu0 0.0
        %380 = vmatpush1.msra.mxu0 0.0
        %381 = vmatprep.subr.mxu0 0.0
        %382 = vmatpush1.msra.mxu0 0.0
        %383 = vmatprep.subr.mxu0 0.0
        %384 = vmatpush1.msra.mxu0 0.0
        %385 = vmatprep.subr.mxu0 0.0
        %386 = vmatpush1.msra.mxu0 0.0
        %387 = vmatprep.subr.mxu0 0.0
        %388 = vmatpush1.msra.mxu0 0.0
        %389 = vmatprep.subr.mxu0 0.0
        %390 = vmatpush1.msra.mxu0 0.0
        %391 = vmatprep.subr.mxu0 0.0
        %392 = vmatpush1.msra.mxu0 0.0
        %393 = vmatprep.subr.mxu0 0.0
        %394 = vmatpush1.msra.mxu0 0.0
        %395 = vmatprep.subr.mxu0 0.0
        %396 = vmatpush1.msra.mxu0 0.0
        %397 = vmatprep.subr.mxu0 0.0
        %398 = vmatpush1.msra.mxu0 0.0
        %399 = vmatprep.subr.mxu0 0.0
        %400 = vmatpush1.msra.mxu0 0.0
        %401 = vmatprep.subr.mxu0 0.0
        %402 = vmatpush1.msra.mxu0 0.0
        %403 = vmatprep.subr.mxu0 0.0
        %404 = vmatpush1.msra.mxu0 0.0
        %405 = vmatprep.subr.mxu0 0.0
        %406 = vmatpush1.msra.mxu0 0.0
        %407 = vmatprep.subr.mxu0 0.0
        %408 = vmatpush1.msra.mxu0 0.0
        %409 = vmatprep.subr.mxu0 0.0
        %410 = vmatpush1.msra.mxu0 0.0
        %411 = vmatprep.subr.mxu0 0.0
        %412 = vmatpush1.msra.mxu0 0.0
        %413 = vmatprep.subr.mxu0 0.0
        %414 = vmatpush1.msra.mxu0 0.0
        %415 = vmatprep.subr.mxu0 0.0
        %416 = vmatpush1.msra.mxu0 0.0
        %417 = vmatprep.subr.mxu0 0.0
        %418 = vmatpush1.msra.mxu0 0.0
        %419 = vmatprep.subr.mxu0 0.0
        %420 = vmatpush1.msra.mxu0 0.0
        %421 = vmatprep.subr.mxu0 0.0
        %422 = vmatpush1.msra.mxu0 0.0
        %423 = vmatprep.subr.mxu0 0.0
        %424 = vmatpush1.msra.mxu0 0.0
        %425 = vmatprep.mubr.f32.mxu0 0.0
        %426 = vmatmul.mubr.f32.gmra.mrb[0].mxu0 %v216
        %v427 = vpop.f32.mrb[0].mxu0
        %v428 = vadd.f32 0.0, %v427
        %v429 = vpop.f32.mrb[0].mxu0
        %v430 = vadd.f32 0.0, %v429
        %431 = vmatprep.mubr.f32.mxu0 0.0
        %432 = vmatmul.mubr.f32.gmra.mrb[0].mxu0 %v219
        %v433 = vpop.f32.mrb[0].mxu0
        %v434 = vadd.f32 0.0, %v433
        %v435 = vpop.f32.mrb[0].mxu0
        %v436 = vadd.f32 0.0, %v435
        %437 = vmatprep.mubr.f32.mxu0 0.0
        %438 = vmatmul.mubr.f32.gmra.mrb[0].mxu0 %v222
        %v439 = vpop.f32.mrb[0].mxu0
        %v440 = vadd.f32 0.0, %v439
        %v441 = vpop.f32.mrb[0].mxu0
        %v442 = vadd.f32 0.0, %v441
        %443 = vmatprep.mubr.f32.mxu0 0.0
        %444 = vmatmul.mubr.f32.gmra.mrb[0].mxu0 %v225
        %v445 = vpop.f32.mrb[0].mxu0
        %v446 = vadd.f32 0.0, %v445
        %v447 = vpop.f32.mrb[0].mxu0
        %v448 = vadd.f32 0.0, %v447
        %449 = vmatprep.mubr.f32.mxu0 0.0
        %450 = vmatmul.mubr.f32.gmra.mrb[0].mxu0 %v228
        %v451 = vpop.f32.mrb[0].mxu0
        %v452 = vadd.f32 0.0, %v451
        %v453 = vpop.f32.mrb[0].mxu0
        %v454 = vadd.f32 0.0, %v453
        %455 = vmatprep.mubr.f32.mxu0 0.0
        %456 = vmatmul.mubr.f32.gmra.mrb[0].mxu0 %v231
        %v457 = vpop.f32.mrb[0].mxu0
        %v458 = vadd.f32 0.0, %v457
        %v459 = vpop.f32.mrb[0].mxu0
        %v460 = vadd.f32 0.0, %v459
        %461 = vmatprep.mubr.f32.mxu0 0.0
        %462 = vmatmul.mubr.f32.gmra.mrb[0].mxu0 %v234
        %v463 = vpop.f32.mrb[0].mxu0
        %v464 = vadd.f32 0.0, %v463
        %v465 = vpop.f32.mrb[0].mxu0
        %v466 = vadd.f32 0.0, %v465
        %467 = vmatprep.mubr.f32.mxu0 0.0
        %468 = vmatmul.mubr.f32.gmra.mrb[0].mxu0 %v237
        %v469 = vpop.f32.mrb[0].mxu0
        %v470 = vadd.f32 0.0, %v469
        %v471 = vpop.f32.mrb[0].mxu0
        %v472 = vadd.f32 0.0, %v471
        %473 = vdwg.mxu0
        %v474 = vmul.f32 %v315, 0.8164966
        %v475 = vmul.f32 %v317, 0.8164966
        %v476 = vmul.f32 %v428, 0.8164966
        %v477 = vmul.f32 %v430, 0.8164966
        %v478 = vmul.f32 %v321, 0.8164966
        %v479 = vmul.f32 %v323, 0.8164966
        %v480 = vmul.f32 %v434, 0.8164966
        %v481 = vmul.f32 %v436, 0.8164966
        %v482 = vmul.f32 %v327, 0.8164966
        %v483 = vmul.f32 %v329, 0.8164966
        %v484 = vmul.f32 %v440, 0.8164966
        %v485 = vmul.f32 %v442, 0.8164966
        %v486 = vmul.f32 %v333, 0.8164966
        %v487 = vmul.f32 %v335, 0.8164966
        %v488 = vmul.f32 %v446, 0.8164966
        %v489 = vmul.f32 %v448, 0.8164966
        %v490 = vmul.f32 %v339, 0.8164966
        %v491 = vmul.f32 %v341, 0.8164966
        %v492 = vmul.f32 %v452, 0.8164966
        %v493 = vmul.f32 %v454, 0.8164966
        %v494 = vmul.f32 %v345, 0.8164966
        %v495 = vmul.f32 %v347, 0.8164966
        %v496 = vmul.f32 %v458, 0.8164966
        %v497 = vmul.f32 %v460, 0.8164966
        %v498 = vmul.f32 %v351, 0.8164966
        %v499 = vmul.f32 %v353, 0.8164966
        %v500 = vmul.f32 %v464, 0.8164966
        %v501 = vmul.f32 %v466, 0.8164966
        %v502 = vmul.f32 %v357, 0.8164966
        %v503 = vmul.f32 %v359, 0.8164966
        %v504 = vmul.f32 %v470, 0.8164966
        %v505 = vmul.f32 %v472, 0.8164966
        %v506 = vld [vmem:[%s2] sm:$0xf]
        %v508 = vlaneseq
        %v509 = vshrl.u32 %v508, 7
        %v510 = vsub.s32 0, %v509
        %v511 = vrot.slane %v506, %v510
        %v512 = vlaneseq
        %v513 = vshrl.u32 %v512, 7
        %v514 = vsub.s32 1, %v513
        %v515 = vrot.slane %v506, %v514
        %v516 = vlaneseq
        %v517 = vshrl.u32 %v516, 7
        %v518 = vsub.s32 2, %v517
        %v519 = vrot.slane %v506, %v518
        %v520 = vlaneseq
        %v521 = vshrl.u32 %v520, 7
        %v522 = vsub.s32 3, %v521
        %v523 = vrot.slane %v506, %v522
        %v528 = vadd.f32 %v474, %v511
        %v529 = vadd.f32 %v475, %v515
        %v530 = vadd.f32 %v476, %v519
        %v531 = vadd.f32 %v477, %v523
        %v532 = vadd.f32 %v478, %v511
        %v533 = vadd.f32 %v479, %v515
        %v534 = vadd.f32 %v480, %v519
        %v535 = vadd.f32 %v481, %v523
        %v536 = vadd.f32 %v482, %v511
        %v537 = vadd.f32 %v483, %v515
        %v538 = vadd.f32 %v484, %v519
        %v539 = vadd.f32 %v485, %v523
        %v540 = vadd.f32 %v486, %v511
        %v541 = vadd.f32 %v487, %v515
        %v542 = vadd.f32 %v488, %v519
        %v543 = vadd.f32 %v489, %v523
        %v544 = vadd.f32 %v490, %v511
        %v545 = vadd.f32 %v491, %v515
        %v546 = vadd.f32 %v492, %v519
        %v547 = vadd.f32 %v493, %v523
        %v548 = vadd.f32 %v494, %v511
        %v549 = vadd.f32 %v495, %v515
        %v550 = vadd.f32 %v496, %v519
        %v551 = vadd.f32 %v497, %v523
        %v552 = vadd.f32 %v498, %v511
        %v553 = vadd.f32 %v499, %v515
        %v554 = vadd.f32 %v500, %v519
        %v555 = vadd.f32 %v501, %v523
        %v556 = vadd.f32 %v502, %v511
        %v557 = vadd.f32 %v503, %v515
        %v558 = vadd.f32 %v504, %v519
        %v559 = vadd.f32 %v505, %v523
        %560 = vst [vmem:[%s188] sm:$0xff] %v528
        %561 = vst [vmem:[%s188 + $0x8] sm:$0xff] %v529
        %562 = vst [vmem:[%s188 + $0x10] sm:$0xff] %v530
        %563 = vst [vmem:[%s188 + $0x18] sm:$0xff] %v531
        %564 = vst [vmem:[%s188 + $0x20] sm:$0xff] %v532
        %565 = vst [vmem:[%s188 + $0x28] sm:$0xff] %v533
        %566 = vst [vmem:[%s188 + $0x30] sm:$0xff] %v534
        %567 = vst [vmem:[%s188 + $0x38] sm:$0xff] %v535
        %568 = vst [vmem:[%s188 + $0x40] sm:$0xff] %v536
        %569 = vst [vmem:[%s188 + $0x48] sm:$0xff] %v537
        %570 = vst [vmem:[%s188 + $0x50] sm:$0xff] %v538
        %571 = vst [vmem:[%s188 + $0x58] sm:$0xff] %v539
        %572 = vst [vmem:[%s188 + $0x60] sm:$0xff] %v540
        %573 = vst [vmem:[%s188 + $0x68] sm:$0xff] %v541
        %574 = vst [vmem:[%s188 + $0x70] sm:$0xff] %v542
        %575 = vst [vmem:[%s188 + $0x78] sm:$0xff] %v543
        %576 = vst [vmem:[%s188 + $0x80] sm:$0xff] %v544
        %577 = vst [vmem:[%s188 + $0x88] sm:$0xff] %v545
        %578 = vst [vmem:[%s188 + $0x90] sm:$0xff] %v546
        %579 = vst [vmem:[%s188 + $0x98] sm:$0xff] %v547
        %580 = vst [vmem:[%s188 + $0xa0] sm:$0xff] %v548
        %581 = vst [vmem:[%s188 + $0xa8] sm:$0xff] %v549
        %582 = vst [vmem:[%s188 + $0xb0] sm:$0xff] %v550
        %583 = vst [vmem:[%s188 + $0xb8] sm:$0xff] %v551
        %584 = vst [vmem:[%s188 + $0xc0] sm:$0xff] %v552
        %585 = vst [vmem:[%s188 + $0xc8] sm:$0xff] %v553
        %586 = vst [vmem:[%s188 + $0xd0] sm:$0xff] %v554
        %587 = vst [vmem:[%s188 + $0xd8] sm:$0xff] %v555
        %588 = vst [vmem:[%s188 + $0xe0] sm:$0xff] %v556
        %589 = vst [vmem:[%s188 + $0xe8] sm:$0xff] %v557
        %590 = vst [vmem:[%s188 + $0xf0] sm:$0xff] %v558
        %591 = vst [vmem:[%s188 + $0xf8] sm:$0xff] %v559
        %s592 = sand.u32 %s109, 1
        %s593 = scalar_lea.sflag [#allocation3], %s592
        %s594 = sand.u32 %s109, 1
        %s595 = smul.addr %s594, 256
        %s596 = scalar_lea.vmem [#allocation2], %s595
        // Predicated region
        $region33: #{tpu_custom_call.1} parent=31 // pred_check
          %p597 = pneg %p119
        $region34: #{tpu_custom_call.1} parent=31 // pred_check_branch
          %599 = sbr.rel (%p597) target = $region36
        $region35: #{tpu_custom_call.1} parent=31 // pred_region
          %s600 = smul.u32 8, %s22
          %s602 = ssub.s32 4096, 4096
          %603 = vsyncadd %s593, %s602
          %s604 = smul.addr %s600, 4
          %s605 = smul.addr %s21, 32
          %s606 = sadd.s32 %s604, %s605
          %s607 = smul.addr %s606, 128
          %s608 = scalar_lea.hbm %s3, %s607
          %s609 = sshll.u32 %s596, 4
          %s610 = int_to_ptr.vmem [resolvable:$true] %s609
          %615 = dma.vmem_to_hbm [thread:$0]  %s610, 4096, %s608, %s593, 512, 512, 32
        $region36: #{tpu_custom_call.1} parent=31 // pred_fallthru
          _
      $region32: #{tpu_custom_call.1} parent=5 // pred_fallthru
        _
      %p616 = scmp.le.s32.totalorder 2, %s12
      // Predicated region
      $region37: #{tpu_custom_call.1} parent=5 // pred_check
        %p617 = pneg %p616
      $region38: #{tpu_custom_call.1} parent=5 // pred_check_branch
        %619 = sbr.rel (%p617) target = $region40
      $region39: #{tpu_custom_call.1} parent=5 // pred_region
        %s620 = ssub.s32 %s12, 2
        // Predicated region
        $region41: #{tpu_custom_call.1} parent=39 // pred_check
          %p621 = pneg %p125
        $region42: #{tpu_custom_call.1} parent=39 // pred_check_branch
          %623 = sbr.rel (%p621) target = $region44
        $region43: #{tpu_custom_call.1} parent=39 // pred_region
          %s624 = sand.u32 %s110, 1
          %s625 = scalar_lea.sflag [#allocation3], %s624
          %s626 = sand.u32 %s110, 1
          %s627 = smul.addr %s626, 256
          %s628 = scalar_lea.vmem [#allocation2], %s627
          %629 = dma.done %s625, 4096
        $region44: #{tpu_custom_call.1} parent=39 // pred_fallthru
          _
      $region40: #{tpu_custom_call.1} parent=5 // pred_fallthru
        _
    $region6: #{tpu_custom_call.1} parent=1 // loop_footer
      %s16 = sadd.s32 1, %s12
    $region7: #{tpu_custom_call.1} parent=1 // loop_footer_branch
      %11 = sbr.rel target = $region3
    $region8: #{tpu_custom_call.1} parent=1 // loop_exit
      _
    %630 = vsyncpa [#allocation3], 1
    %s631 = scalar_lea.sflag [#allocation3], 1
    %632 = vsyncpa %s631, 1

</llo_original>
